<compile_context>
chip_gen: v5e
topology: v5e:2x2
jax: 0.10.0
libtpu: 0.0.40
codegen_flags: <defaults>
</compile_context>

<pallas_src>
import functools

import jax
import jax.numpy as jnp
from jax import lax
from jax.experimental import pallas as pl
from jax.experimental.pallas import tpu as pltpu

LANE = 128      # vreg lane width    -> feature dim padded to a multiple of this
SUBLANE = 8     # vreg sublane width -> batch dim padded to a multiple of this
MAX_BATCH_TILE = 256


def _round_up(n, m):
    return ((n + m - 1) // m) * m


# ---------------------------------------------------------------------------
# Kernel math (shared by the single-eval and fused-Euler kernels)
# ---------------------------------------------------------------------------
def _odefunc_math(x, w1, b1, w2, b2):
    """y = tanh(tanh(x @ w1 + b1) @ w2 + b2), f32 MXU accumulation."""
    h = jnp.tanh(jnp.dot(x, w1, preferred_element_type=jnp.float32) + b1)
    # Explicit precision choice: feed layer-1 activations to the MXU in the
    # weight dtype (f32 here; intentional bf16 downcast if weights are bf16).
    y = jnp.dot(h.astype(w2.dtype), w2, preferred_element_type=jnp.float32) + b2
    return jnp.tanh(y)


def odefunc_kernel(x_ref, w1_ref, b1_ref, w2_ref, b2_ref, o_ref):
    out = _odefunc_math(x_ref[...].astype(jnp.float32),
                        w1_ref[...], b1_ref[...], w2_ref[...], b2_ref[...])
    o_ref[...] = out.astype(o_ref.dtype)


def fused_euler_kernel(x_ref, w1_ref, b1_ref, w2_ref, b2_ref, o_ref,
                       *, num_steps, dt):
    # Load weights / biases ONCE; they are loop-invariant and stay in
    # vregs/VMEM for every solver sub-step.
    w1 = w1_ref[...]
    b1 = b1_ref[...]
    w2 = w2_ref[...]
    b2 = b2_ref[...]

    def body(_, x):
        return x + dt * _odefunc_math(x, w1, b1, w2, b2)

    x0 = x_ref[...].astype(jnp.float32)
    # Short fixed trip-count -> unroll so the LLO scheduler sees the whole
    # chain and can overlap MXU / EUP / VPU work across sub-steps.
    xN = lax.fori_loop(0, num_steps, body, x0, unroll=True)
    o_ref[...] = xN.astype(o_ref.dtype)


# ---------------------------------------------------------------------------
# Host-side wrappers
# ---------------------------------------------------------------------------
def _pad_inputs(x, w1, b1, w2, b2):
    """Zero-pad to lane-dense features / sublane-aligned batch (no-op if aligned)."""
    batch, hidden = x.shape
    hp = _round_up(hidden, LANE)
    tm = min(MAX_BATCH_TILE, _round_up(batch, SUBLANE))  # batch tile
    bp = _round_up(batch, tm)

    b1 = b1.reshape(1, hidden)
    b2 = b2.reshape(1, hidden)

    if bp != batch or hp != hidden:
        x = jnp.zeros((bp, hp), x.dtype).at[:batch, :hidden].set(x)
    if hp != hidden:
        w1 = jnp.zeros((hp, hp), w1.dtype).at[:hidden, :hidden].set(w1)
        w2 = jnp.zeros((hp, hp), w2.dtype).at[:hidden, :hidden].set(w2)
        b1 = jnp.zeros((1, hp), b1.dtype).at[:, :hidden].set(b1)
        b2 = jnp.zeros((1, hp), b2.dtype).at[:, :hidden].set(b2)
    return x, w1, b1, w2, b2, tm, bp, hp


def _run_kernel(kernel, xp, w1p, b1p, w2p, b2p, tm, bp, hp, out_dtype):
    grid = (bp // tm,)
    return pl.pallas_call(
        kernel,
        out_shape=jax.ShapeDtypeStruct((bp, hp), out_dtype),
        grid_spec=pltpu.PrefetchScalarGridSpec(
            num_scalar_prefetch=0,
            grid=grid,
            in_specs=[
                pl.BlockSpec((tm, hp), lambda i: (i, 0)),   # x tile
                pl.BlockSpec((hp, hp), lambda i: (0, 0)),   # w1 (batch-resident)
                pl.BlockSpec((1, hp), lambda i: (0, 0)),    # b1
                pl.BlockSpec((hp, hp), lambda i: (0, 0)),   # w2 (batch-resident)
                pl.BlockSpec((1, hp), lambda i: (0, 0)),    # b2
            ],
            out_specs=pl.BlockSpec((tm, hp), lambda i: (i, 0)),
        ),
        compiler_params=pltpu.CompilerParams(
            dimension_semantics=("parallel",),   # shard batch across v7x's 2 TCs
        ),
    )(xp, w1p, b1p, w2p, b2p)


def ode_func(t, x, w1, b1, w2, b2):
    """Pallas equivalent of ODEFunc.forward(t, x). `t` is unused (matches PyTorch)."""
    del t  # ODEFunc ignores t
    batch, hidden = x.shape
    xp, w1p, b1p, w2p, b2p, tm, bp, hp = _pad_inputs(x, w1, b1, w2, b2)
    out = _run_kernel(odefunc_kernel, xp, w1p, b1p, w2p, b2p, tm, bp, hp, x.dtype)
    if (bp, hp) != (batch, hidden):
        out = out[:batch, :hidden]
    return out


def ode_func_euler_fused(t0, x, w1, b1, w2, b2, *, num_steps=8, dt=0.125):
    """Fused explicit-Euler solve: x_{k+1} = x_k + dt * ODEFunc(t, x_k).

    One pallas_call total; weights stay VMEM/vreg-resident across all
    `num_steps` RHS evaluations (zero-padding is exactly preserved by the
    update, so padded lanes stay zero)."""
    del t0  # ODEFunc ignores t
    batch, hidden = x.shape
    xp, w1p, b1p, w2p, b2p, tm, bp, hp = _pad_inputs(x, w1, b1, w2, b2)
    kernel = functools.partial(fused_euler_kernel,
                               num_steps=int(num_steps), dt=float(dt))
    out = _run_kernel(kernel, xp, w1p, b1p, w2p, b2p, tm, bp, hp, x.dtype)
    if (bp, hp) != (batch, hidden):
        out = out[:batch, :hidden]
    return out


def init_params(key, hidden_dim, dtype=jnp.float32):
    """Deterministic init mimicking nn.Linear default (uniform +/- 1/sqrt(fan_in))."""
    k1, k2, k3, k4 = jax.random.split(key, 4)
    bound = 1.0 / (hidden_dim ** 0.5)
    # Stored as (in_dim, out_dim) == transpose of PyTorch's (out, in) weight.
    w1 = jax.random.uniform(k1, (hidden_dim, hidden_dim), dtype, -bound, bound)
    b1 = jax.random.uniform(k2, (1, hidden_dim), dtype, -bound, bound)
    w2 = jax.random.uniform(k3, (hidden_dim, hidden_dim), dtype, -bound, bound)
    b2 = jax.random.uniform(k4, (1, hidden_dim), dtype, -bound, bound)
    return w1, b1, w2, b2
    # TODO(synk): for hidden >~1024 tile w1/w2 over K/N panels (and prefer bf16
    # weights) to respect v7x's 64 MiB VMEM; unnecessary at these shapes.


if __name__ == "__main__":
    batch, hidden_dim = 8, 32
    key = jax.random.PRNGKey(0)
    kx, kp = jax.random.split(key)

    x = jax.random.normal(kx, (batch, hidden_dim), jnp.float32)
    t = jnp.float32(0.0)  # unused, kept for signature parity with forward(t, x)
    w1, b1, w2, b2 = init_params(kp, hidden_dim)

    # --- single RHS evaluation (matches ODEFunc.forward) ---
    out = jax.block_until_ready(ode_func(t, x, w1, b1, w2, b2))
    ref = jnp.tanh(jnp.tanh(x @ w1 + b1) @ w2 + b2)
    assert out.shape == (batch, hidden_dim)
    assert jnp.allclose(out, ref, atol=1e-5, rtol=1e-5), "single-eval mismatch"

    # --- fused Euler integration (weights resident across steps) ---
    num_steps, dt = 8, 0.125
    out2 = jax.block_until_ready(
        ode_func_euler_fused(t, x, w1, b1, w2, b2, num_steps=num_steps, dt=dt))
    xr = x
    for _ in range(num_steps):
        xr = xr + dt * jnp.tanh(jnp.tanh(xr @ w1 + b1) @ w2 + b2)
    assert out2.shape == (batch, hidden_dim)
    assert jnp.allclose(out2, xr, atol=1e-4, rtol=1e-4), "fused-euler mismatch"

    print("KERNEL_OK")
</pallas_src>

<mosaic_0001>
module attributes {stable_mosaic.version = 11 : i64} {
  func.func @odefunc_kernel(%arg0: i32, %arg1: memref<8x128xf32, #tpu.memory_space<vmem>>, %arg2: memref<128x128xf32, #tpu.memory_space<vmem>>, %arg3: memref<1x128xf32, #tpu.memory_space<vmem>>, %arg4: memref<128x128xf32, #tpu.memory_space<vmem>>, %arg5: memref<1x128xf32, #tpu.memory_space<vmem>>, %arg6: memref<8x128xf32, #tpu.memory_space<vmem>>) attributes {dimension_semantics = [#tpu.dimension_semantics<parallel>], iteration_bounds = array<i64: 1>, scalar_prefetch = 0 : i64, scratch_operands = 0 : i64, tpu.core_type = #tpu.core_type<tc>, window_params = [{transform_indices = @transform_0, window_bounds = array<i64: 8, 128>}, {pipeline_mode = #tpu.pipeline_mode<synchronous>, transform_indices = @transform_1, window_bounds = array<i64: 128, 128>}, {pipeline_mode = #tpu.pipeline_mode<synchronous>, transform_indices = @transform_2, window_bounds = array<i64: 1, 128>}, {pipeline_mode = #tpu.pipeline_mode<synchronous>, transform_indices = @transform_3, window_bounds = array<i64: 128, 128>}, {pipeline_mode = #tpu.pipeline_mode<synchronous>, transform_indices = @transform_4, window_bounds = array<i64: 1, 128>}, {transform_indices = @transform_5, window_bounds = array<i64: 8, 128>}]} {
    %c0 = arith.constant 0 : index
    %c0_0 = arith.constant 0 : index
    %0 = vector.load %arg1[%c0, %c0_0] : memref<8x128xf32, #tpu.memory_space<vmem>>, vector<8x128xf32>
    %c0_1 = arith.constant 0 : index
    %c0_2 = arith.constant 0 : index
    %1 = vector.load %arg2[%c0_1, %c0_2] : memref<128x128xf32, #tpu.memory_space<vmem>>, vector<128x128xf32>
    %c0_3 = arith.constant 0 : index
    %c0_4 = arith.constant 0 : index
    %2 = vector.load %arg3[%c0_3, %c0_4] : memref<1x128xf32, #tpu.memory_space<vmem>>, vector<1x128xf32>
    %c0_5 = arith.constant 0 : index
    %c0_6 = arith.constant 0 : index
    %3 = vector.load %arg4[%c0_5, %c0_6] : memref<128x128xf32, #tpu.memory_space<vmem>>, vector<128x128xf32>
    %c0_7 = arith.constant 0 : index
    %c0_8 = arith.constant 0 : index
    %4 = vector.load %arg5[%c0_7, %c0_8] : memref<1x128xf32, #tpu.memory_space<vmem>>, vector<1x128xf32>
    %cst = arith.constant dense<0.000000e+00> : vector<8x128xf32>
    %5 = tpu.matmul %0, %1, %cst {dimension_numbers = #tpu.dot_dimension_numbers<[1], [0], [0], [1], [0, 0, 1, 1], [], []>} : vector<8x128xf32>, vector<128x128xf32>, vector<8x128xf32> -> vector<8x128xf32>
    %6 = vector.broadcast %2 : vector<1x128xf32> to vector<8x128xf32>
    %7 = arith.addf %5, %6 : vector<8x128xf32>
    %8 = math.tanh %7 : vector<8x128xf32>
    %cst_9 = arith.constant dense<0.000000e+00> : vector<8x128xf32>
    %9 = tpu.matmul %8, %3, %cst_9 {dimension_numbers = #tpu.dot_dimension_numbers<[1], [0], [0], [1], [0, 0, 1, 1], [], []>} : vector<8x128xf32>, vector<128x128xf32>, vector<8x128xf32> -> vector<8x128xf32>
    %10 = vector.broadcast %4 : vector<1x128xf32> to vector<8x128xf32>
    %11 = arith.addf %9, %10 : vector<8x128xf32>
    %12 = math.tanh %11 : vector<8x128xf32>
    %c0_10 = arith.constant 0 : index
    %c0_11 = arith.constant 0 : index
    %13 = vector.load %arg6[%c0_10, %c0_11] : memref<8x128xf32, #tpu.memory_space<vmem>>, vector<8x128xf32>
    tpu.vector_store %arg6[%c0_10, %c0_11], %12 {strides = array<i32>} : memref<8x128xf32, #tpu.memory_space<vmem>>, vector<8x128xf32>,
    return
  }
  func.func @transform_0(%arg0: i32) -> (i32, i32) {
    %c0_i32 = arith.constant 0 : i32
    %c0_i32_0 = arith.constant 0 : i32
    return %arg0, %c0_i32 : i32, i32
  }
  func.func @transform_1(%arg0: i32) -> (i32, i32) {
    %c0_i32 = arith.constant 0 : i32
    %c0_i32_0 = arith.constant 0 : i32
    %c0_i32_1 = arith.constant 0 : i32
    return %c0_i32, %c0_i32_0 : i32, i32
  }
  func.func @transform_2(%arg0: i32) -> (i32, i32) {
    %c0_i32 = arith.constant 0 : i32
    %c0_i32_0 = arith.constant 0 : i32
    %c0_i32_1 = arith.constant 0 : i32
    return %c0_i32, %c0_i32_0 : i32, i32
  }
  func.func @transform_3(%arg0: i32) -> (i32, i32) {
    %c0_i32 = arith.constant 0 : i32
    %c0_i32_0 = arith.constant 0 : i32
    %c0_i32_1 = arith.constant 0 : i32
    return %c0_i32, %c0_i32_0 : i32, i32
  }
  func.func @transform_4(%arg0: i32) -> (i32, i32) {
    %c0_i32 = arith.constant 0 : i32
    %c0_i32_0 = arith.constant 0 : i32
    %c0_i32_1 = arith.constant 0 : i32
    return %c0_i32, %c0_i32_0 : i32, i32
  }
  func.func @transform_5(%arg0: i32) -> (i32, i32) {
    %c0_i32 = arith.constant 0 : i32
    %c0_i32_0 = arith.constant 0 : i32
    return %arg0, %c0_i32 : i32, i32
  }
}

</mosaic_0001>

<llo_original>
// kernel: tpu_custom_call.1
$region0: #{tpu_custom_call.1}
  #allocation0 [shape = 'u32[]', space=smem, size = 0x4, offset = 0x4, fixed_abs, tag = 'smem constant byte address 0x4 - core index']
  #allocation1 [shape = 'u32[72,128]{1,0:T(1,128)}', space=vmem, size = 0x9000, scoped, tag = 'internal scratch']
  %s0 = inlined_call_operand.hbm [shape: f32[8,128], index: 0, kind: input, shape index: {}]
  %s1 = inlined_call_operand.hbm [shape: f32[128,128], index: 1, kind: input, shape index: {}]
  %s2 = inlined_call_operand.vmem [shape: f32[1,128], index: 2, kind: input, shape index: {}]
  %s3 = inlined_call_operand.hbm [shape: f32[128,128], index: 3, kind: input, shape index: {}]
  %s4 = inlined_call_operand.vmem [shape: f32[1,128], index: 4, kind: input, shape index: {}]
  %s5 = inlined_call_operand.hbm [shape: f32[8,128], index: 5, kind: output, shape index: {}]
  %s6 = sld [smem:[#allocation0]]
  $region42: #{tpu_custom_call.1} parent=0
    _
  %s8 = ssub.s32 1, %s6
  %s9 = scalar_select 0, %s8, %s6
  $region1: #{tpu_custom_call.1} parent=0
    #allocation2 [shape = 'u8[4096]{0}', space=vmem, size = 0x1000, scoped, tag = 'input window, operand 0, single buffered']
    #allocation3 [shape = 's32[1]{0}', space=sflag, size = 0x4, scoped, tag = 'scoped memory for tpu_custom_call.1']
    #allocation4 [shape = 's32[1]{0}', space=sflag, size = 0x4, scoped, tag = 'scoped memory for tpu_custom_call.1']
    #allocation5 [shape = 'u8[65536]{0}', space=vmem, size = 0x10000, scoped, tag = 'input window, operand 1, single buffered']
    #allocation6 [shape = 's32[1]{0}', space=sflag, size = 0x4, scoped, tag = 'scoped memory for tpu_custom_call.1']
    #allocation7 [shape = 'u8[65536]{0}', space=vmem, size = 0x10000, scoped, tag = 'input window, operand 3, single buffered']
    #allocation8 [shape = 'u8[4096]{0}', space=vmem, size = 0x1000, scoped, tag = 'output window, operand 0, single buffered']
    %10 = vsyncpa [#allocation3], 0
    %11 = vsyncpa [#allocation6], 0
    %12 = vsyncpa [#allocation4], 0
    // Predicated region
    $region2: #{tpu_custom_call.1} parent=1 // pred_check
      _
    $region3: #{tpu_custom_call.1} parent=1 // pred_check_branch
      %14 = sbr.rel (0) target = $region5
    $region4: #{tpu_custom_call.1} parent=1 // pred_region
      %16 = vsyncadd [#allocation3], 0
      %s18 = sshll.u32 %s0, 4
      %s19 = int_to_ptr.hbm [resolvable:$true] %s18
      %s20 = sshll.u32 [#allocation2], 4
      %s21 = int_to_ptr.vmem [resolvable:$true] %s20
      %23 = dma.hbm_to_vmem [thread:$0]  %s19, 128, %s21, [#allocation3]
    $region5: #{tpu_custom_call.1} parent=1 // pred_fallthru
      _
    // Predicated region
    $region6: #{tpu_custom_call.1} parent=1 // pred_check
      _
    $region7: #{tpu_custom_call.1} parent=1 // pred_check_branch
      %25 = sbr.rel (0) target = $region9
    $region8: #{tpu_custom_call.1} parent=1 // pred_region
      %27 = vsyncadd [#allocation6], 0
      %s28 = sshll.u32 %s1, 4
      %s29 = int_to_ptr.hbm [resolvable:$true] %s28
      %s30 = sshll.u32 [#allocation5], 4
      %s31 = int_to_ptr.vmem [resolvable:$true] %s30
      %36 = dma.hbm_to_vmem [thread:$0]  %s29, 2048, %s31, [#allocation6], 128, 128, 8
    $region9: #{tpu_custom_call.1} parent=1 // pred_fallthru
      _
    // Predicated region
    $region10: #{tpu_custom_call.1} parent=1 // pred_check
      _
    $region11: #{tpu_custom_call.1} parent=1 // pred_check_branch
      %38 = sbr.rel (0) target = $region13
    $region12: #{tpu_custom_call.1} parent=1 // pred_region
      _
    $region13: #{tpu_custom_call.1} parent=1 // pred_fallthru
      _
    // Predicated region
    $region14: #{tpu_custom_call.1} parent=1 // pred_check
      _
    $region15: #{tpu_custom_call.1} parent=1 // pred_check_branch
      %40 = sbr.rel (0) target = $region17
    $region16: #{tpu_custom_call.1} parent=1 // pred_region
      %42 = vsyncadd [#allocation6], 0
      %s43 = sshll.u32 %s3, 4
      %s44 = int_to_ptr.hbm [resolvable:$true] %s43
      %s45 = sshll.u32 [#allocation7], 4
      %s46 = int_to_ptr.vmem [resolvable:$true] %s45
      %51 = dma.hbm_to_vmem [thread:$0]  %s44, 2048, %s46, [#allocation6], 128, 128, 8
    $region17: #{tpu_custom_call.1} parent=1 // pred_fallthru
      _
    // Predicated region
    $region18: #{tpu_custom_call.1} parent=1 // pred_check
      _
    $region19: #{tpu_custom_call.1} parent=1 // pred_check_branch
      %53 = sbr.rel (0) target = $region21
    $region20: #{tpu_custom_call.1} parent=1 // pred_region
      _
    $region21: #{tpu_custom_call.1} parent=1 // pred_fallthru
      _
    // Predicated region
    $region22: #{tpu_custom_call.1} parent=1 // pred_check
      _
    $region23: #{tpu_custom_call.1} parent=1 // pred_check_branch
      %55 = sbr.rel (0) target = $region25
    $region24: #{tpu_custom_call.1} parent=1 // pred_region
      %57 = dma.done [#allocation3], 128
    $region25: #{tpu_custom_call.1} parent=1 // pred_fallthru
      _
    // Predicated region
    $region26: #{tpu_custom_call.1} parent=1 // pred_check
      _
    $region27: #{tpu_custom_call.1} parent=1 // pred_check_branch
      %59 = sbr.rel (0) target = $region29
    $region28: #{tpu_custom_call.1} parent=1 // pred_region
      %61 = dma.done [#allocation6], 2048
    $region29: #{tpu_custom_call.1} parent=1 // pred_fallthru
      _
    // Predicated region
    $region30: #{tpu_custom_call.1} parent=1 // pred_check
      _
    $region31: #{tpu_custom_call.1} parent=1 // pred_check_branch
      %63 = sbr.rel (0) target = $region33
    $region32: #{tpu_custom_call.1} parent=1 // pred_region
      %65 = dma.done [#allocation6], 2048
    $region33: #{tpu_custom_call.1} parent=1 // pred_fallthru
      _
    %v66 = vld [vmem:[#allocation2] sm:$0xff]
    %v67 = vld [vmem:[#allocation5] sm:$0xff]
    %v68 = vld [vmem:[#allocation5 + $0x8] sm:$0xff]
    %v69 = vld [vmem:[#allocation5 + $0x10] sm:$0xff]
    %v70 = vld [vmem:[#allocation5 + $0x18] sm:$0xff]
    %v71 = vld [vmem:[#allocation5 + $0x20] sm:$0xff]
    %v72 = vld [vmem:[#allocation5 + $0x28] sm:$0xff]
    %v73 = vld [vmem:[#allocation5 + $0x30] sm:$0xff]
    %v74 = vld [vmem:[#allocation5 + $0x38] sm:$0xff]
    %v75 = vld [vmem:[#allocation5 + $0x40] sm:$0xff]
    %v76 = vld [vmem:[#allocation5 + $0x48] sm:$0xff]
    %v77 = vld [vmem:[#allocation5 + $0x50] sm:$0xff]
    %v78 = vld [vmem:[#allocation5 + $0x58] sm:$0xff]
    %v79 = vld [vmem:[#allocation5 + $0x60] sm:$0xff]
    %v80 = vld [vmem:[#allocation5 + $0x68] sm:$0xff]
    %v81 = vld [vmem:[#allocation5 + $0x70] sm:$0xff]
    %v82 = vld [vmem:[#allocation5 + $0x78] sm:$0xff]
    %v83 = vld [vmem:[%s2] sm:$0x1]
    %v84 = vld [vmem:[#allocation7] sm:$0xff]
    %v85 = vld [vmem:[#allocation7 + $0x8] sm:$0xff]
    %v86 = vld [vmem:[#allocation7 + $0x10] sm:$0xff]
    %v87 = vld [vmem:[#allocation7 + $0x18] sm:$0xff]
    %v88 = vld [vmem:[#allocation7 + $0x20] sm:$0xff]
    %v89 = vld [vmem:[#allocation7 + $0x28] sm:$0xff]
    %v90 = vld [vmem:[#allocation7 + $0x30] sm:$0xff]
    %v91 = vld [vmem:[#allocation7 + $0x38] sm:$0xff]
    %v92 = vld [vmem:[#allocation7 + $0x40] sm:$0xff]
    %v93 = vld [vmem:[#allocation7 + $0x48] sm:$0xff]
    %v94 = vld [vmem:[#allocation7 + $0x50] sm:$0xff]
    %v95 = vld [vmem:[#allocation7 + $0x58] sm:$0xff]
    %v96 = vld [vmem:[#allocation7 + $0x60] sm:$0xff]
    %v97 = vld [vmem:[#allocation7 + $0x68] sm:$0xff]
    %v98 = vld [vmem:[#allocation7 + $0x70] sm:$0xff]
    %v99 = vld [vmem:[#allocation7 + $0x78] sm:$0xff]
    %v100 = vld [vmem:[%s4] sm:$0x1]
    %v102 = vperm.slane %v83, 0
    %104 = vmatpush.msra.mxu0 %v82
    %105 = vmatpush.msra.mxu0 %v81
    %106 = vmatpush.msra.mxu0 %v80
    %107 = vmatpush.msra.mxu0 %v79
    %108 = vmatpush.msra.mxu0 %v78
    %109 = vmatpush.msra.mxu0 %v77
    %110 = vmatpush.msra.mxu0 %v76
    %111 = vmatpush.msra.mxu0 %v75
    %112 = vmatpush.msra.mxu0 %v74
    %113 = vmatpush.msra.mxu0 %v73
    %114 = vmatpush.msra.mxu0 %v72
    %115 = vmatpush.msra.mxu0 %v71
    %116 = vmatpush.msra.mxu0 %v70
    %117 = vmatpush.msra.mxu0 %v69
    %118 = vmatpush.msra.mxu0 %v68
    %119 = vmatpush.msra.mxu0 %v67
    %120 = vmatmul.f32.gmra.mxu0 %v66
    %v121 = vpop.f32.mrf.mxu0
    %v122 = vadd.f32 %v102, %v121
    %123 = vdwg.mxu0
    %v124 = vtanh.pop %v122
    %v126 = vperm.slane %v100, 0
    %128 = vmatpush.msra.mxu0 %v99
    %129 = vmatpush.msra.mxu0 %v98
    %130 = vmatpush.msra.mxu0 %v97
    %131 = vmatpush.msra.mxu0 %v96
    %132 = vmatpush.msra.mxu0 %v95
    %133 = vmatpush.msra.mxu0 %v94
    %134 = vmatpush.msra.mxu0 %v93
    %135 = vmatpush.msra.mxu0 %v92
    %136 = vmatpush.msra.mxu0 %v91
    %137 = vmatpush.msra.mxu0 %v90
    %138 = vmatpush.msra.mxu0 %v89
    %139 = vmatpush.msra.mxu0 %v88
    %140 = vmatpush.msra.mxu0 %v87
    %141 = vmatpush.msra.mxu0 %v86
    %142 = vmatpush.msra.mxu0 %v85
    %143 = vmatpush.msra.mxu0 %v84
    %144 = vmatmul.f32.gmra.mxu0 %v124
    %v145 = vpop.f32.mrf.mxu0
    %v146 = vadd.f32 %v126, %v145
    %147 = vdwg.mxu0
    %v148 = vtanh.pop %v146
    %149 = vst [vmem:[#allocation8] sm:$0xff] %v148
    // Predicated region
    $region34: #{tpu_custom_call.1} parent=1 // pred_check
      _
    $region35: #{tpu_custom_call.1} parent=1 // pred_check_branch
      %151 = sbr.rel (0) target = $region37
    $region36: #{tpu_custom_call.1} parent=1 // pred_region
      %153 = vsyncadd [#allocation4], 0
      %s155 = sshll.u32 [#allocation8], 4
      %s156 = int_to_ptr.vmem [resolvable:$true] %s155
      %s157 = sshll.u32 %s5, 4
      %s158 = int_to_ptr.hbm [resolvable:$true] %s157
      %160 = dma.vmem_to_hbm [thread:$0]  %s156, 128, %s158, [#allocation4]
    $region37: #{tpu_custom_call.1} parent=1 // pred_fallthru
      _
    // Predicated region
    $region38: #{tpu_custom_call.1} parent=1 // pred_check
      _
    $region39: #{tpu_custom_call.1} parent=1 // pred_check_branch
      %162 = sbr.rel (0) target = $region41
    $region40: #{tpu_custom_call.1} parent=1 // pred_region
      %164 = dma.done [#allocation4], 128
    $region41: #{tpu_custom_call.1} parent=1 // pred_fallthru
      _
    %165 = vsyncpa [#allocation3], 1
    %166 = vsyncpa [#allocation6], 1
    %167 = vsyncpa [#allocation4], 1

</llo_original>
